<compile_context>
chip_gen: v5e
topology: v5e:2x2
jax: 0.10.0
libtpu: 0.0.40
codegen_flags: <defaults>
</compile_context>

<pallas_src>
import math
from typing import List, Optional

import jax
import jax.numpy as jnp
from jax.experimental import pallas as pl
from jax.experimental.pallas import tpu as pltpu


def _round_up(x: int, m: int) -> int:
    return ((x + m - 1) // m) * m


def _device_kind() -> str:
    try:
        return jax.devices()[0].device_kind.lower()
    except Exception:  # pragma: no cover
        return ""


def _vmem_capacity_bytes() -> int:
    """Per-TensorCore VMEM capacity (64 MiB on v7x, 128 MiB on v5e/v6e)."""
    try:
        cap = int(pltpu.get_tpu_info().vmem_capacity_bytes)
        if cap > 0:
            return cap
    except Exception:
        pass
    kind = _device_kind()
    return (64 << 20) if "v7" in kind else (128 << 20)


def _num_tensorcores() -> int:
    """TensorCores a 1-D 'parallel' grid can be sharded across."""
    kind = _device_kind()
    return 2 if ("v7" in kind or "v4" in kind or "v5p" in kind) else 1


def _bf16_eup() -> bool:
    """v6e/v7x have a bf16 EUP/VPU; older generations do tanh in f32."""
    kind = _device_kind()
    return not any(tag in kind for tag in ("v2", "v3", "v4", "v5"))


def _make_fused_kernel(num_layers: int, bf16_tanh: bool):
    """Kernel computing tanh(...tanh(x @ W0 + b0)... @ W_{L-1} + b_{L-1})."""

    def kernel(*refs):
        x_ref = refs[0]
        o_ref = refs[-1]
        wb_refs = refs[1:-1]
        # Feed the MXU bf16; accumulate in f32.
        h = x_ref[...].astype(jnp.bfloat16)
        for li in range(num_layers):
            w = wb_refs[2 * li][...]        # (Kp, Np) bf16, VMEM-resident
            b = wb_refs[2 * li + 1][...]    # (1, Np) f32
            y = jnp.dot(h, w, preferred_element_type=jnp.float32) + b
            if li == num_layers - 1:
                # Final tanh in f32 for output precision, then store.
                o_ref[...] = jnp.tanh(y).astype(o_ref.dtype)
            elif bf16_tanh:
                # h is immediately consumed as bf16 by the next matmul; doing
                # tanh in bf16 doubles EUP throughput on v6e/v7x.
                h = jnp.tanh(y.astype(jnp.bfloat16))
            else:
                h = jnp.tanh(y).astype(jnp.bfloat16)

    return kernel


def _resident_spec(shape, use_buffered: bool) -> pl.BlockSpec:
    """Constant-index (VMEM-resident) spec; single-buffered when supported."""
    if use_buffered:
        try:
            return pl.BlockSpec(shape, lambda i: (0, 0),
                                pipeline_mode=pl.Buffered(1))
        except TypeError:
            pass
    return pl.BlockSpec(shape, lambda i: (0, 0))


class LinearPallas:
    """JAX/Pallas equivalent of pyannote.audio models.linear.Linear."""

    def __init__(self, n_features: int, hidden_size: List[int] = [256, 128],
                 bias: bool = True, key=None,
                 out_dtype: Optional[jnp.dtype] = None):
        self.n_features = n_features
        self.hidden_size = list(hidden_size)
        self.bias = bias
        self.out_dtype = out_dtype          # None -> match input dtype
        self._bf16_tanh = _bf16_eup()
        if key is None:
            key = jax.random.PRNGKey(0)

        # Logical f32 parameters (reference / external use).
        self.weights = []   # each (in_features, out_features), f32
        self.biases = []    # each (out_features,), f32
        # Kernel parameters: lane-padded, bf16 weights / f32 biases.
        self._w_pad = []    # (Kp_in, Np_out) bf16
        self._b_pad = []    # (1, Np_out) f32

        in_f = n_features
        # TODO(synk): if n_features is very odd (not multiple of 16) and the
        # producer can emit a padded feature dim, pad kp_in/x upstream; a
        # standalone pad op on x would cost a full extra HBM read+write.
        kp_in = n_features          # first layer K stays unpadded (x is unpadded)
        for out_f in self.hidden_size:
            key, kw, kb = jax.random.split(key, 3)
            bound = 1.0 / math.sqrt(in_f)   # torch.nn.Linear default init
            w = jax.random.uniform(kw, (in_f, out_f), jnp.float32, -bound, bound)
            if bias:
                b = jax.random.uniform(kb, (out_f,), jnp.float32, -bound, bound)
            else:
                b = jnp.zeros((out_f,), jnp.float32)
            self.weights.append(w)
            self.biases.append(b)

            np_out = _round_up(out_f, 128)  # lane-dense output / intermediate
            w_pad = jnp.zeros((kp_in, np_out), jnp.bfloat16)
            w_pad = w_pad.at[:in_f, :out_f].set(w.astype(jnp.bfloat16))
            b_pad = jnp.zeros((1, np_out), jnp.float32)
            b_pad = b_pad.at[:, :out_f].set(b)
            self._w_pad.append(w_pad)
            self._b_pad.append(b_pad)

            in_f = out_f
            kp_in = np_out

    @property
    def num_layers(self) -> int:
        return len(self.hidden_size)

    @property
    def dimension(self) -> int:
        return self.hidden_size[-1]

    # ------------------------------------------------------------------ tiling
    def _choose_tm(self, M: int, per_row_bytes: int, resident_bytes: int,
                   vmem_cap: int) -> int:
        budget = int(vmem_cap * 0.70)            # headroom for internal scratch
        tm = max((budget - resident_bytes) // max(per_row_bytes, 1), 8)
        tm = min(tm, 2048)                       # diminishing returns past ~1-2K
        tm = min(tm, _round_up(M, 8))            # never exceed the row count
        # Dual-TC chips (v7x): keep >=2 grid blocks only when blocks stay large.
        if _num_tensorcores() > 1 and M >= 512:
            half = _round_up(pl.cdiv(M, 2), 8)
            if half >= 256:
                tm = min(tm, half)
        tm = max((tm // 8) * 8, 8)               # sublane-aligned
        return tm

    # ------------------------------------------------------------------ forward
    def __call__(self, features: jax.Array) -> jax.Array:
        # features: (batch, n_frames, n_features) or (batch, n_features)
        orig_shape = features.shape
        x = features.reshape(-1, orig_shape[-1])
        M, K0 = x.shape

        out_dtype = jnp.dtype(self.out_dtype) if self.out_dtype is not None \
            else x.dtype
        out_itemsize = jnp.dtype(out_dtype).itemsize
        x_itemsize = jnp.dtype(x.dtype).itemsize

        n_last = self.hidden_size[-1]
        np_last = self._w_pad[-1].shape[1]
        max_np = max(w.shape[1] for w in self._w_pad)

        # VMEM accounting (conservative: count weights double-buffered in case
        # the Buffered(1) request is not honored).
        resident_bytes = 2 * sum(
            w.size * w.dtype.itemsize + b.size * b.dtype.itemsize
            for w, b in zip(self._w_pad, self._b_pad))
        per_row_bytes = (2 * K0 * x_itemsize          # input block, double-buffered
                         + 2 * np_last * out_itemsize  # output block, double-buffered
                         + 3 * max_np * 4)             # live f32/bf16 intermediates

        vmem_cap = _vmem_capacity_bytes()
        TM = self._choose_tm(M, per_row_bytes, resident_bytes, vmem_cap)
        grid = (pl.cdiv(M, TM),)

        est_bytes = resident_bytes + TM * per_row_bytes + (4 << 20)
        vmem_limit = int(min(int(vmem_cap * 0.90), max(32 << 20, est_bytes)))

        # Advisory cost estimate for XLA's scheduler.
        flops = 2 * M * sum(w.shape[0] * w.shape[1]
                            for w in (wt for wt in self.weights))
        transcendentals = M * sum(self.hidden_size)
        bytes_accessed = (M * K0 * x_itemsize
                          + M * np_last * out_itemsize
                          + sum(w.size * w.dtype.itemsize
                                + b.size * b.dtype.itemsize
                                for w, b in zip(self._w_pad, self._b_pad)))
        cost = pl.CostEstimate(flops=flops,
                               transcendentals=transcendentals,
                               bytes_accessed=bytes_accessed)

        args = [x]
        for w, b in zip(self._w_pad, self._b_pad):
            args.extend([w, b])

        def _run(use_buffered: bool):
            in_specs = [pl.BlockSpec((TM, K0), lambda i: (i, 0))]
            for w, b in zip(self._w_pad, self._b_pad):
                in_specs.append(_resident_spec(w.shape, use_buffered))
                in_specs.append(_resident_spec(b.shape, use_buffered))
            return pl.pallas_call(
                _make_fused_kernel(self.num_layers, self._bf16_tanh),
                out_shape=jax.ShapeDtypeStruct((M, np_last), out_dtype),
                grid=grid,
                in_specs=in_specs,
                out_specs=pl.BlockSpec((TM, np_last), lambda i: (i, 0)),
                compiler_params=pltpu.CompilerParams(
                    dimension_semantics=("parallel",),
                    vmem_limit_bytes=vmem_limit,
                ),
                cost_estimate=cost,
            )(*args)

        try:
            out = _run(True)
        except Exception:
            # Fallback if pipeline_mode=pl.Buffered(1) is rejected at lowering.
            out = _run(False)

        if np_last != n_last:
            # Only when the last hidden size is not 128-aligned.
            out = out[:, :n_last]
        return out.reshape(*orig_shape[:-1], n_last)


def _reference(features, weights, biases):
    x = features
    for w, b in zip(weights, biases):
        x = jnp.tanh(x @ w + b)
    return x


if __name__ == "__main__":
    key = jax.random.PRNGKey(0)
    batch, n_frames, n_features = 2, 8, 32
    kin, kmod1, kmod2 = jax.random.split(key, 3)
    features = jax.random.normal(kin, (batch, n_frames, n_features), jnp.float32)

    # Default pyannote config [256, 128]: lane-aligned output -> no post slice.
    model = LinearPallas(n_features, hidden_size=[256, 128], bias=True, key=kmod1)
    out = jax.block_until_ready(model(features))
    assert out.shape == (batch, n_frames, 128), out.shape
    ref = _reference(features, model.weights, model.biases)
    # bf16 MXU inputs + f32 accumulate -> loosened tolerance vs f32 reference.
    assert jnp.allclose(out, ref, atol=5e-2, rtol=5e-2), \
        float(jnp.max(jnp.abs(out - ref)))

    # Unaligned output (exercises padded-store + slice path) and 2-D input path.
    model2 = LinearPallas(n_features, hidden_size=[64, 48], bias=True, key=kmod2)
    out2 = jax.block_until_ready(model2(features[:, 0, :]))
    assert out2.shape == (batch, 48), out2.shape
    ref2 = _reference(features[:, 0, :], model2.weights, model2.biases)
    assert jnp.allclose(out2, ref2, atol=5e-2, rtol=5e-2), \
        float(jnp.max(jnp.abs(out2 - ref2)))

    print("KERNEL_OK")
</pallas_src>

<mosaic_0001>
module attributes {stable_mosaic.version = 11 : i64} {
  func.func @kernel(%arg0: i32, %arg1: memref<16x32xf32, #tpu.memory_space<vmem>>, %arg2: memref<32x256xbf16, #tpu.memory_space<vmem>>, %arg3: memref<1x256xf32, #tpu.memory_space<vmem>>, %arg4: memref<256x128xbf16, #tpu.memory_space<vmem>>, %arg5: memref<1x128xf32, #tpu.memory_space<vmem>>, %arg6: memref<16x128xf32, #tpu.memory_space<vmem>>) attributes {dimension_semantics = [#tpu.dimension_semantics<parallel>], iteration_bounds = array<i64: 1>, scalar_prefetch = 0 : i64, scratch_operands = 0 : i64, tpu.core_type = #tpu.core_type<tc>, window_params = [{transform_indices = @transform_0, window_bounds = array<i64: 16, 32>}, {pipeline_mode = #tpu.pipeline_mode<synchronous>, transform_indices = @transform_1, window_bounds = array<i64: 32, 256>}, {pipeline_mode = #tpu.pipeline_mode<synchronous>, transform_indices = @transform_2, window_bounds = array<i64: 1, 256>}, {pipeline_mode = #tpu.pipeline_mode<synchronous>, transform_indices = @transform_3, window_bounds = array<i64: 256, 128>}, {pipeline_mode = #tpu.pipeline_mode<synchronous>, transform_indices = @transform_4, window_bounds = array<i64: 1, 128>}, {transform_indices = @transform_5, window_bounds = array<i64: 16, 128>}]} {
    %c0 = arith.constant 0 : index
    %c0_0 = arith.constant 0 : index
    %0 = vector.load %arg1[%c0, %c0_0] : memref<16x32xf32, #tpu.memory_space<vmem>>, vector<16x32xf32>
    %1 = arith.truncf %0 : vector<16x32xf32> to vector<16x32xbf16>
    %c0_1 = arith.constant 0 : index
    %c0_2 = arith.constant 0 : index
    %2 = vector.load %arg2[%c0_1, %c0_2] : memref<32x256xbf16, #tpu.memory_space<vmem>>, vector<32x256xbf16>
    %c0_3 = arith.constant 0 : index
    %c0_4 = arith.constant 0 : index
    %3 = vector.load %arg3[%c0_3, %c0_4] : memref<1x256xf32, #tpu.memory_space<vmem>>, vector<1x256xf32>
    %cst = arith.constant dense<0.000000e+00> : vector<16x256xf32>
    %4 = tpu.matmul %1, %2, %cst {dimension_numbers = #tpu.dot_dimension_numbers<[1], [0], [0], [1], [0, 0, 1, 1], [], []>} : vector<16x32xbf16>, vector<32x256xbf16>, vector<16x256xf32> -> vector<16x256xf32>
    %5 = vector.broadcast %3 : vector<1x256xf32> to vector<16x256xf32>
    %6 = arith.addf %4, %5 : vector<16x256xf32>
    %7 = arith.truncf %6 : vector<16x256xf32> to vector<16x256xbf16>
    %8 = math.tanh %7 : vector<16x256xbf16>
    %c0_5 = arith.constant 0 : index
    %c0_6 = arith.constant 0 : index
    %9 = vector.load %arg4[%c0_5, %c0_6] : memref<256x128xbf16, #tpu.memory_space<vmem>>, vector<256x128xbf16>
    %c0_7 = arith.constant 0 : index
    %c0_8 = arith.constant 0 : index
    %10 = vector.load %arg5[%c0_7, %c0_8] : memref<1x128xf32, #tpu.memory_space<vmem>>, vector<1x128xf32>
    %cst_9 = arith.constant dense<0.000000e+00> : vector<16x128xf32>
    %11 = tpu.matmul %8, %9, %cst_9 {dimension_numbers = #tpu.dot_dimension_numbers<[1], [0], [0], [1], [0, 0, 1, 1], [], []>} : vector<16x256xbf16>, vector<256x128xbf16>, vector<16x128xf32> -> vector<16x128xf32>
    %12 = vector.broadcast %10 : vector<1x128xf32> to vector<16x128xf32>
    %13 = arith.addf %11, %12 : vector<16x128xf32>
    %14 = math.tanh %13 : vector<16x128xf32>
    %c0_10 = arith.constant 0 : index
    %c0_11 = arith.constant 0 : index
    %15 = vector.load %arg6[%c0_10, %c0_11] : memref<16x128xf32, #tpu.memory_space<vmem>>, vector<16x128xf32>
    tpu.vector_store %arg6[%c0_10, %c0_11], %14 {strides = array<i32>} : memref<16x128xf32, #tpu.memory_space<vmem>>, vector<16x128xf32>,
    return
  }
  func.func @transform_0(%arg0: i32) -> (i32, i32) {
    %c0_i32 = arith.constant 0 : i32
    %c0_i32_0 = arith.constant 0 : i32
    return %arg0, %c0_i32 : i32, i32
  }
  func.func @transform_1(%arg0: i32) -> (i32, i32) {
    %c0_i32 = arith.constant 0 : i32
    %c0_i32_0 = arith.constant 0 : i32
    %c0_i32_1 = arith.constant 0 : i32
    return %c0_i32, %c0_i32_0 : i32, i32
  }
  func.func @transform_2(%arg0: i32) -> (i32, i32) {
    %c0_i32 = arith.constant 0 : i32
    %c0_i32_0 = arith.constant 0 : i32
    %c0_i32_1 = arith.constant 0 : i32
    return %c0_i32, %c0_i32_0 : i32, i32
  }
  func.func @transform_3(%arg0: i32) -> (i32, i32) {
    %c0_i32 = arith.constant 0 : i32
    %c0_i32_0 = arith.constant 0 : i32
    %c0_i32_1 = arith.constant 0 : i32
    return %c0_i32, %c0_i32_0 : i32, i32
  }
  func.func @transform_4(%arg0: i32) -> (i32, i32) {
    %c0_i32 = arith.constant 0 : i32
    %c0_i32_0 = arith.constant 0 : i32
    %c0_i32_1 = arith.constant 0 : i32
    return %c0_i32, %c0_i32_0 : i32, i32
  }
  func.func @transform_5(%arg0: i32) -> (i32, i32) {
    %c0_i32 = arith.constant 0 : i32
    %c0_i32_0 = arith.constant 0 : i32
    return %arg0, %c0_i32 : i32, i32
  }
}

module attributes {stable_mosaic.version = 11 : i64} {
  func.func @kernel(%arg0: i32, %arg1: memref<16x32xf32, #tpu.memory_space<vmem>>, %arg2: memref<32x256xbf16, #tpu.memory_space<vmem>>, %arg3: memref<1x256xf32, #tpu.memory_space<vmem>>, %arg4: memref<256x128xbf16, #tpu.memory_space<vmem>>, %arg5: memref<1x128xf32, #tpu.memory_space<vmem>>, %arg6: memref<16x128xf32, #tpu.memory_space<vmem>>) attributes {dimension_semantics = [#tpu.dimension_semantics<parallel>], iteration_bounds = array<i64: 1>, scalar_prefetch = 0 : i64, scratch_operands = 0 : i64, tpu.core_type = #tpu.core_type<tc>, window_params = [{transform_indices = @transform_0, window_bounds = array<i64: 16, 32>}, {pipeline_mode = #tpu.pipeline_mode<synchronous>, transform_indices = @transform_1, window_bounds = array<i64: 32, 256>}, {pipeline_mode = #tpu.pipeline_mode<synchronous>, transform_indices = @transform_2, window_bounds = array<i64: 1, 256>}, {pipeline_mode = #tpu.pipeline_mode<synchronous>, transform_indices = @transform_3, window_bounds = array<i64: 256, 128>}, {pipeline_mode = #tpu.pipeline_mode<synchronous>, transform_indices = @transform_4, window_bounds = array<i64: 1, 128>}, {transform_indices = @transform_5, window_bounds = array<i64: 16, 128>}]} {
    %c0 = arith.constant 0 : index
    %c0_0 = arith.constant 0 : index
    %0 = vector.load %arg1[%c0, %c0_0] : memref<16x32xf32, #tpu.memory_space<vmem>>, vector<16x32xf32>
    %1 = arith.truncf %0 : vector<16x32xf32> to vector<16x32xbf16>
    %c0_1 = arith.constant 0 : index
    %c0_2 = arith.constant 0 : index
    %2 = vector.load %arg2[%c0_1, %c0_2] : memref<32x256xbf16, #tpu.memory_space<vmem>>, vector<32x256xbf16>
    %c0_3 = arith.constant 0 : index
    %c0_4 = arith.constant 0 : index
    %3 = vector.load %arg3[%c0_3, %c0_4] : memref<1x256xf32, #tpu.memory_space<vmem>>, vector<1x256xf32>
    %cst = arith.constant dense<0.000000e+00> : vector<16x256xf32>
    %4 = tpu.matmul %1, %2, %cst {dimension_numbers = #tpu.dot_dimension_numbers<[1], [0], [0], [1], [0, 0, 1, 1], [], []>} : vector<16x32xbf16>, vector<32x256xbf16>, vector<16x256xf32> -> vector<16x256xf32>
    %5 = vector.broadcast %3 : vector<1x256xf32> to vector<16x256xf32>
    %6 = arith.addf %4, %5 : vector<16x256xf32>
    %7 = arith.truncf %6 : vector<16x256xf32> to vector<16x256xbf16>
    %8 = math.tanh %7 : vector<16x256xbf16>
    %c0_5 = arith.constant 0 : index
    %c0_6 = arith.constant 0 : index
    %9 = vector.load %arg4[%c0_5, %c0_6] : memref<256x128xbf16, #tpu.memory_space<vmem>>, vector<256x128xbf16>
    %c0_7 = arith.constant 0 : index
    %c0_8 = arith.constant 0 : index
    %10 = vector.load %arg5[%c0_7, %c0_8] : memref<1x128xf32, #tpu.memory_space<vmem>>, vector<1x128xf32>
    %cst_9 = arith.constant dense<0.000000e+00> : vector<16x128xf32>
    %11 = tpu.matmul %8, %9, %cst_9 {dimension_numbers = #tpu.dot_dimension_numbers<[1], [0], [0], [1], [0, 0, 1, 1], [], []>} : vector<16x256xbf16>, vector<256x128xbf16>, vector<16x128xf32> -> vector<16x128xf32>
    %12 = vector.broadcast %10 : vector<1x128xf32> to vector<16x128xf32>
    %13 = arith.addf %11, %12 : vector<16x128xf32>
    %14 = math.tanh %13 : vector<16x128xf32>
    %c0_10 = arith.constant 0 : index
    %c0_11 = arith.constant 0 : index
    %15 = vector.load %arg6[%c0_10, %c0_11] : memref<16x128xf32, #tpu.memory_space<vmem>>, vector<16x128xf32>
    tpu.vector_store %arg6[%c0_10, %c0_11], %14 {strides = array<i32>} : memref<16x128xf32, #tpu.memory_space<vmem>>, vector<16x128xf32>,
    return
  }
  func.func @transform_0(%arg0: i32) -> (i32, i32) {
    %c0_i32 = arith.constant 0 : i32
    %c0_i32_0 = arith.constant 0 : i32
    return %arg0, %c0_i32 : i32, i32
  }
  func.func @transform_1(%arg0: i32) -> (i32, i32) {
    %c0_i32 = arith.constant 0 : i32
    %c0_i32_0 = arith.constant 0 : i32
    %c0_i32_1 = arith.constant 0 : i32
    return %c0_i32, %c0_i32_0 : i32, i32
  }
  func.func @transform_2(%arg0: i32) -> (i32, i32) {
    %c0_i32 = arith.constant 0 : i32
    %c0_i32_0 = arith.constant 0 : i32
    %c0_i32_1 = arith.constant 0 : i32
    return %c0_i32, %c0_i32_0 : i32, i32
  }
  func.func @transform_3(%arg0: i32) -> (i32, i32) {
    %c0_i32 = arith.constant 0 : i32
    %c0_i32_0 = arith.constant 0 : i32
    %c0_i32_1 = arith.constant 0 : i32
    return %c0_i32, %c0_i32_0 : i32, i32
  }
  func.func @transform_4(%arg0: i32) -> (i32, i32) {
    %c0_i32 = arith.constant 0 : i32
    %c0_i32_0 = arith.constant 0 : i32
    %c0_i32_1 = arith.constant 0 : i32
    return %c0_i32, %c0_i32_0 : i32, i32
  }
  func.func @transform_5(%arg0: i32) -> (i32, i32) {
    %c0_i32 = arith.constant 0 : i32
    %c0_i32_0 = arith.constant 0 : i32
    return %arg0, %c0_i32 : i32, i32
  }
}

</mosaic_0001>

<llo_original>
// kernel: tpu_custom_call.1
$region0: #{tpu_custom_call.1}
  #allocation0 [shape = 'u32[]', space=smem, size = 0x4, offset = 0x4, fixed_abs, tag = 'smem constant byte address 0x4 - core index']
  #allocation1 [shape = 'u32[72,128]{1,0:T(1,128)}', space=vmem, size = 0x9000, scoped, tag = 'internal scratch']
  %s0 = inlined_call_operand.hbm [shape: f32[16,32], index: 0, kind: input, shape index: {}]
  %s1 = inlined_call_operand.hbm [shape: bf16[32,256], index: 1, kind: input, shape index: {}]
  %s2 = inlined_call_operand.hbm [shape: f32[1,256], index: 2, kind: input, shape index: {}]
  %s3 = inlined_call_operand.hbm [shape: bf16[256,128], index: 3, kind: input, shape index: {}]
  %s4 = inlined_call_operand.vmem [shape: f32[1,128], index: 4, kind: input, shape index: {}]
  %s5 = inlined_call_operand.hbm [shape: f32[16,128], index: 5, kind: output, shape index: {}]
  %s6 = sld [smem:[#allocation0]]
  $region46: #{tpu_custom_call.1} parent=0
    _
  %s8 = ssub.s32 1, %s6
  %s9 = scalar_select 0, %s8, %s6
  $region1: #{tpu_custom_call.1} parent=0
    #allocation2 [shape = 'u8[8192]{0}', space=vmem, size = 0x2000, scoped, tag = 'input window, operand 0, single buffered']
    #allocation3 [shape = 's32[1]{0}', space=sflag, size = 0x4, scoped, tag = 'scoped memory for tpu_custom_call.1']
    #allocation4 [shape = 's32[1]{0}', space=sflag, size = 0x4, scoped, tag = 'scoped memory for tpu_custom_call.1']
    #allocation5 [shape = 'u8[16384]{0}', space=vmem, size = 0x4000, scoped, tag = 'input window, operand 1, single buffered']
    #allocation6 [shape = 's32[1]{0}', space=sflag, size = 0x4, scoped, tag = 'scoped memory for tpu_custom_call.1']
    #allocation7 [shape = 'u8[1024]{0}', space=vmem, size = 0x400, scoped, tag = 'input window, operand 2, single buffered']
    #allocation8 [shape = 'u8[65536]{0}', space=vmem, size = 0x10000, scoped, tag = 'input window, operand 3, single buffered']
    #allocation9 [shape = 's32[1]{0}', space=sflag, size = 0x4, scoped, tag = 'scoped memory for tpu_custom_call.1']
    #allocation10 [shape = 'u8[8192]{0}', space=vmem, size = 0x2000, scoped, tag = 'output window, operand 0, single buffered']
    %10 = vsyncpa [#allocation3], 0
    %11 = vsyncpa [#allocation6], 0
    %12 = vsyncpa [#allocation9], 0
    %13 = vsyncpa [#allocation4], 0
    // Predicated region
    $region2: #{tpu_custom_call.1} parent=1 // pred_check
      _
    $region3: #{tpu_custom_call.1} parent=1 // pred_check_branch
      %15 = sbr.rel (0) target = $region5
    $region4: #{tpu_custom_call.1} parent=1 // pred_region
      %17 = vsyncadd [#allocation3], 0
      %s18 = sshll.u32 %s0, 4
      %s19 = int_to_ptr.hbm [resolvable:$true] %s18
      %s20 = sshll.u32 [#allocation2], 4
      %s21 = int_to_ptr.vmem [resolvable:$true] %s20
      %26 = dma.hbm_to_vmem [thread:$0]  %s19, 256, %s21, [#allocation3], 128, 128, 8
    $region5: #{tpu_custom_call.1} parent=1 // pred_fallthru
      _
    // Predicated region
    $region6: #{tpu_custom_call.1} parent=1 // pred_check
      _
    $region7: #{tpu_custom_call.1} parent=1 // pred_check_branch
      %28 = sbr.rel (0) target = $region9
    $region8: #{tpu_custom_call.1} parent=1 // pred_region
      %30 = vsyncadd [#allocation6], 0
      %s31 = sshll.u32 %s1, 4
      %s32 = int_to_ptr.hbm [resolvable:$true] %s31
      %s33 = sshll.u32 [#allocation5], 4
      %s34 = int_to_ptr.vmem [resolvable:$true] %s33
      %39 = dma.hbm_to_vmem [thread:$0]  %s32, 512, %s34, [#allocation6], 128, 128, 8
    $region9: #{tpu_custom_call.1} parent=1 // pred_fallthru
      _
    // Predicated region
    $region10: #{tpu_custom_call.1} parent=1 // pred_check
      _
    $region11: #{tpu_custom_call.1} parent=1 // pred_check_branch
      %41 = sbr.rel (0) target = $region13
    $region12: #{tpu_custom_call.1} parent=1 // pred_region
      %43 = vsyncadd [#allocation6], 0
      %s45 = sshll.u32 %s2, 4
      %s46 = int_to_ptr.hbm [resolvable:$true] %s45
      %s47 = sshll.u32 [#allocation7], 4
      %s48 = int_to_ptr.vmem [resolvable:$true] %s47
      %50 = dma.hbm_to_vmem [thread:$0]  %s46, 32, %s48, [#allocation6]
    $region13: #{tpu_custom_call.1} parent=1 // pred_fallthru
      _
    // Predicated region
    $region14: #{tpu_custom_call.1} parent=1 // pred_check
      _
    $region15: #{tpu_custom_call.1} parent=1 // pred_check_branch
      %52 = sbr.rel (0) target = $region17
    $region16: #{tpu_custom_call.1} parent=1 // pred_region
      %54 = vsyncadd [#allocation9], 0
      %s55 = sshll.u32 %s3, 4
      %s56 = int_to_ptr.hbm [resolvable:$true] %s55
      %s57 = sshll.u32 [#allocation8], 4
      %s58 = int_to_ptr.vmem [resolvable:$true] %s57
      %63 = dma.hbm_to_vmem [thread:$0]  %s56, 2048, %s58, [#allocation9], 64, 64, 4
    $region17: #{tpu_custom_call.1} parent=1 // pred_fallthru
      _
    // Predicated region
    $region18: #{tpu_custom_call.1} parent=1 // pred_check
      _
    $region19: #{tpu_custom_call.1} parent=1 // pred_check_branch
      %65 = sbr.rel (0) target = $region21
    $region20: #{tpu_custom_call.1} parent=1 // pred_region
      _
    $region21: #{tpu_custom_call.1} parent=1 // pred_fallthru
      _
    // Predicated region
    $region22: #{tpu_custom_call.1} parent=1 // pred_check
      _
    $region23: #{tpu_custom_call.1} parent=1 // pred_check_branch
      %67 = sbr.rel (0) target = $region25
    $region24: #{tpu_custom_call.1} parent=1 // pred_region
      %69 = dma.done [#allocation3], 256
    $region25: #{tpu_custom_call.1} parent=1 // pred_fallthru
      _
    // Predicated region
    $region26: #{tpu_custom_call.1} parent=1 // pred_check
      _
    $region27: #{tpu_custom_call.1} parent=1 // pred_check_branch
      %71 = sbr.rel (0) target = $region29
    $region28: #{tpu_custom_call.1} parent=1 // pred_region
      %73 = dma.done [#allocation6], 512
    $region29: #{tpu_custom_call.1} parent=1 // pred_fallthru
      _
    // Predicated region
    $region30: #{tpu_custom_call.1} parent=1 // pred_check
      _
    $region31: #{tpu_custom_call.1} parent=1 // pred_check_branch
      %75 = sbr.rel (0) target = $region33
    $region32: #{tpu_custom_call.1} parent=1 // pred_region
      %77 = dma.done [#allocation6], 32
    $region33: #{tpu_custom_call.1} parent=1 // pred_fallthru
      _
    // Predicated region
    $region34: #{tpu_custom_call.1} parent=1 // pred_check
      _
    $region35: #{tpu_custom_call.1} parent=1 // pred_check_branch
      %79 = sbr.rel (0) target = $region37
    $region36: #{tpu_custom_call.1} parent=1 // pred_region
      %81 = dma.done [#allocation9], 2048
    $region37: #{tpu_custom_call.1} parent=1 // pred_fallthru
      _
    %v83 = vld [vmem:[#allocation2] sm:$0xff]
    %v84 = vld [vmem:[#allocation2 + $0x8] sm:$0xff]
    %v85 = vpack.c.bf16 %v84, %v83
    %v86 = vld [vmem:[#allocation5] sm:$0xff]
    %v87 = vld [vmem:[#allocation5 + $0x8] sm:$0xff]
    %v88 = vld [vmem:[#allocation5 + $0x10] sm:$0xff]
    %v89 = vld [vmem:[#allocation5 + $0x18] sm:$0xff]
    %v90 = vld [vmem:[#allocation7] sm:$0x3]
    %v92 = vperm.slane %v90, 0
    %v93 = vperm.slane %v90, 1
    %v100 = vunpack.c.l.b16 %v86
    %v101 = vunpack.c.h.b16 %v86
    %v102 = vunpack.c.l.b16 %v87
    %v103 = vunpack.c.h.b16 %v87
    %v104 = vunpack.c.l.b16 %v88
    %v105 = vunpack.c.h.b16 %v88
    %v106 = vunpack.c.l.b16 %v89
    %v107 = vunpack.c.h.b16 %v89
    %v108 = vpack.c.b16 %v102, %v100
    %v109 = vpack.c.b16 %v103, %v101
    %v110 = vpack.c.b16 %v106, %v104
    %v111 = vpack.c.b16 %v107, %v105
    %vm116 = vcmask 261120
    %v118 = vsel %vm116, %v85, 0
    %120 = vmatpush.bf16.msra.mxu0 0
    %121 = vmatpush.bf16.msra.mxu0 0
    %122 = vmatpush.bf16.msra.mxu0 0
    %123 = vmatpush.bf16.msra.mxu0 0
    %124 = vmatpush.bf16.msra.mxu0 0
    %125 = vmatpush.bf16.msra.mxu0 0
    %126 = vmatpush.bf16.msra.mxu0 %v110
    %127 = vmatpush.bf16.msra.mxu0 %v108
    %128 = vmatmul.bf16.gmra.mxu0 %v118
    %v129 = vpop.f32.mrf.mxu0
    %v130 = vadd.f32 %v92, %v129
    %v131 = vpop.f32.mrf.mxu0
    %v132 = vadd.f32 %v92, %v131
    %133 = vdwg.mxu0
    %134 = vmatpush.bf16.msra.mxu0 0
    %135 = vmatpush.bf16.msra.mxu0 0
    %136 = vmatpush.bf16.msra.mxu0 0
    %137 = vmatpush.bf16.msra.mxu0 0
    %138 = vmatpush.bf16.msra.mxu0 0
    %139 = vmatpush.bf16.msra.mxu0 0
    %140 = vmatpush.bf16.msra.mxu0 %v111
    %141 = vmatpush.bf16.msra.mxu0 %v109
    %142 = vmatmul.bf16.gmra.mxu0 %v118
    %v143 = vpop.f32.mrf.mxu0
    %v144 = vadd.f32 %v93, %v143
    %v145 = vpop.f32.mrf.mxu0
    %v146 = vadd.f32 %v93, %v145
    %147 = vdwg.mxu0
    %v148 = vpack.c.bf16 %v132, %v130
    %v149 = vpack.c.bf16 %v146, %v144
    %v150 = vunpack.c.l.bf16 %v148
    %v151 = vunpack.c.l.bf16 %v149
    %v152 = vunpack.c.h.bf16 %v148
    %v153 = vunpack.c.h.bf16 %v149
    %v154 = vtanh.pop %v150
    %v155 = vtanh.pop %v151
    %v156 = vtanh.pop %v152
    %v157 = vtanh.pop %v153
    %v158 = vpack.c.bf16 %v156, %v154
    %v159 = vpack.c.bf16 %v157, %v155
    %v160 = vld [vmem:[#allocation8] sm:$0xf]
    %v161 = vld [vmem:[#allocation8 + $0x4] sm:$0xf]
    %v162 = vld [vmem:[#allocation8 + $0x8] sm:$0xf]
    %v163 = vld [vmem:[#allocation8 + $0xc] sm:$0xf]
    %v164 = vld [vmem:[#allocation8 + $0x10] sm:$0xf]
    %v165 = vld [vmem:[#allocation8 + $0x14] sm:$0xf]
    %v166 = vld [vmem:[#allocation8 + $0x18] sm:$0xf]
    %v167 = vld [vmem:[#allocation8 + $0x1c] sm:$0xf]
    %v168 = vld [vmem:[#allocation8 + $0x20] sm:$0xf]
    %v169 = vld [vmem:[#allocation8 + $0x24] sm:$0xf]
    %v170 = vld [vmem:[#allocation8 + $0x28] sm:$0xf]
    %v171 = vld [vmem:[#allocation8 + $0x2c] sm:$0xf]
    %v172 = vld [vmem:[#allocation8 + $0x30] sm:$0xf]
    %v173 = vld [vmem:[#allocation8 + $0x34] sm:$0xf]
    %v174 = vld [vmem:[#allocation8 + $0x38] sm:$0xf]
    %v175 = vld [vmem:[#allocation8 + $0x3c] sm:$0xf]
    %v176 = vld [vmem:[#allocation8 + $0x40] sm:$0xf]
    %v177 = vld [vmem:[#allocation8 + $0x44] sm:$0xf]
    %v178 = vld [vmem:[#allocation8 + $0x48] sm:$0xf]
    %v179 = vld [vmem:[#allocation8 + $0x4c] sm:$0xf]
    %v180 = vld [vmem:[#allocation8 + $0x50] sm:$0xf]
    %v181 = vld [vmem:[#allocation8 + $0x54] sm:$0xf]
    %v182 = vld [vmem:[#allocation8 + $0x58] sm:$0xf]
    %v183 = vld [vmem:[#allocation8 + $0x5c] sm:$0xf]
    %v184 = vld [vmem:[#allocation8 + $0x60] sm:$0xf]
    %v185 = vld [vmem:[#allocation8 + $0x64] sm:$0xf]
    %v186 = vld [vmem:[#allocation8 + $0x68] sm:$0xf]
    %v187 = vld [vmem:[#allocation8 + $0x6c] sm:$0xf]
    %v188 = vld [vmem:[#allocation8 + $0x70] sm:$0xf]
    %v189 = vld [vmem:[#allocation8 + $0x74] sm:$0xf]
    %v190 = vld [vmem:[#allocation8 + $0x78] sm:$0xf]
    %v191 = vld [vmem:[#allocation8 + $0x7c] sm:$0xf]
    %v192 = vld [vmem:[%s4] sm:$0x1]
    %v194 = vperm.slane %v192, 0
    %v228 = vunpack.c.l.b16 %v160
    %v229 = vunpack.c.l.b16 %v161
    %v230 = vunpack.c.l.b16 %v162
    %v231 = vunpack.c.l.b16 %v163
    %v232 = vunpack.c.l.b16 %v164
    %v233 = vunpack.c.l.b16 %v165
    %v234 = vunpack.c.l.b16 %v166
    %v235 = vunpack.c.l.b16 %v167
    %v236 = vunpack.c.l.b16 %v168
    %v237 = vunpack.c.l.b16 %v169
    %v238 = vunpack.c.l.b16 %v170
    %v239 = vunpack.c.l.b16 %v171
    %v240 = vunpack.c.l.b16 %v172
    %v241 = vunpack.c.l.b16 %v173
    %v242 = vunpack.c.l.b16 %v174
    %v243 = vunpack.c.l.b16 %v175
    %v244 = vunpack.c.l.b16 %v176
    %v245 = vunpack.c.l.b16 %v177
    %v246 = vunpack.c.l.b16 %v178
    %v247 = vunpack.c.l.b16 %v179
    %v248 = vunpack.c.l.b16 %v180
    %v249 = vunpack.c.l.b16 %v181
    %v250 = vunpack.c.l.b16 %v182
    %v251 = vunpack.c.l.b16 %v183
    %v252 = vunpack.c.l.b16 %v184
    %v253 = vunpack.c.l.b16 %v185
    %v254 = vunpack.c.l.b16 %v186
    %v255 = vunpack.c.l.b16 %v187
    %v256 = vunpack.c.l.b16 %v188
    %v257 = vunpack.c.l.b16 %v189
    %v258 = vunpack.c.l.b16 %v190
    %v259 = vunpack.c.l.b16 %v191
    %v260 = vpack.c.b16 %v229, %v228
    %v261 = vpack.c.b16 %v231, %v230
    %v262 = vpack.c.b16 %v233, %v232
    %v263 = vpack.c.b16 %v235, %v234
    %v264 = vpack.c.b16 %v237, %v236
    %v265 = vpack.c.b16 %v239, %v238
    %v266 = vpack.c.b16 %v241, %v240
    %v267 = vpack.c.b16 %v243, %v242
    %v268 = vpack.c.b16 %v245, %v244
    %v269 = vpack.c.b16 %v247, %v246
    %v270 = vpack.c.b16 %v249, %v248
    %v271 = vpack.c.b16 %v251, %v250
    %v272 = vpack.c.b16 %v253, %v252
    %v273 = vpack.c.b16 %v255, %v254
    %v274 = vpack.c.b16 %v257, %v256
    %v275 = vpack.c.b16 %v259, %v258
    %292 = vmatpush.bf16.msra.mxu0 %v267
    %293 = vmatpush.bf16.msra.mxu0 %v266
    %294 = vmatpush.bf16.msra.mxu0 %v265
    %295 = vmatpush.bf16.msra.mxu0 %v264
    %296 = vmatpush.bf16.msra.mxu0 %v263
    %297 = vmatpush.bf16.msra.mxu0 %v262
    %298 = vmatpush.bf16.msra.mxu0 %v261
    %299 = vmatpush.bf16.msra.mxu0 %v260
    %300 = vmatmul.bf16.gmra.mxu0 %v158
    %v301 = vpop.f32.mrf.mxu0
    %v302 = vadd.f32 %v194, %v301
    %v303 = vpop.f32.mrf.mxu0
    %v304 = vadd.f32 %v194, %v303
    %305 = vdwg.mxu0
    %306 = vmatpush.bf16.msra.mxu0 %v275
    %307 = vmatpush.bf16.msra.mxu0 %v274
    %308 = vmatpush.bf16.msra.mxu0 %v273
    %309 = vmatpush.bf16.msra.mxu0 %v272
    %310 = vmatpush.bf16.msra.mxu0 %v271
    %311 = vmatpush.bf16.msra.mxu0 %v270
    %312 = vmatpush.bf16.msra.mxu0 %v269
    %313 = vmatpush.bf16.msra.mxu0 %v268
    %314 = vmatmul.bf16.gmra.mxu0 %v159
    %v315 = vpop.f32.mrf.mxu0
    %v316 = vadd.f32 %v302, %v315
    %v317 = vpop.f32.mrf.mxu0
    %v318 = vadd.f32 %v304, %v317
    %319 = vdwg.mxu0
    %v320 = vtanh.pop %v316
    %v321 = vtanh.pop %v318
    %322 = vst [vmem:[#allocation10] sm:$0xff] %v320
    %323 = vst [vmem:[#allocation10 + $0x8] sm:$0xff] %v321
    // Predicated region
    $region38: #{tpu_custom_call.1} parent=1 // pred_check
      _
    $region39: #{tpu_custom_call.1} parent=1 // pred_check_branch
      %325 = sbr.rel (0) target = $region41
    $region40: #{tpu_custom_call.1} parent=1 // pred_region
      %327 = vsyncadd [#allocation4], 0
      %s328 = sshll.u32 [#allocation10], 4
      %s329 = int_to_ptr.vmem [resolvable:$true] %s328
      %s330 = sshll.u32 %s5, 4
      %s331 = int_to_ptr.hbm [resolvable:$true] %s330
      %336 = dma.vmem_to_hbm [thread:$0]  %s329, 256, %s331, [#allocation4], 128, 128, 8
    $region41: #{tpu_custom_call.1} parent=1 // pred_fallthru
      _
    // Predicated region
    $region42: #{tpu_custom_call.1} parent=1 // pred_check
      _
    $region43: #{tpu_custom_call.1} parent=1 // pred_check_branch
      %338 = sbr.rel (0) target = $region45
    $region44: #{tpu_custom_call.1} parent=1 // pred_region
      %340 = dma.done [#allocation4], 256
    $region45: #{tpu_custom_call.1} parent=1 // pred_fallthru
      _
    %341 = vsyncpa [#allocation3], 1
    %342 = vsyncpa [#allocation6], 1
    %343 = vsyncpa [#allocation9], 1
    %344 = vsyncpa [#allocation4], 1

// kernel: tpu_custom_call.1
$region0: #{tpu_custom_call.1}
  #allocation0 [shape = 'u32[]', space=smem, size = 0x4, offset = 0x4, fixed_abs, tag = 'smem constant byte address 0x4 - core index']
  #allocation1 [shape = 'u32[72,128]{1,0:T(1,128)}', space=vmem, size = 0x9000, scoped, tag = 'internal scratch']
  %s0 = inlined_call_operand.hbm [shape: f32[16,32], index: 0, kind: input, shape index: {}]
  %s1 = inlined_call_operand.hbm [shape: bf16[32,256], index: 1, kind: input, shape index: {}]
  %s2 = inlined_call_operand.hbm [shape: f32[1,256], index: 2, kind: input, shape index: {}]
  %s3 = inlined_call_operand.hbm [shape: bf16[256,128], index: 3, kind: input, shape index: {}]
  %s4 = inlined_call_operand.vmem [shape: f32[1,128], index: 4, kind: input, shape index: {}]
  %s5 = inlined_call_operand.hbm [shape: f32[16,128], index: 5, kind: output, shape index: {}]
  %s6 = sld [smem:[#allocation0]]
  $region46: #{tpu_custom_call.1} parent=0
    _
  %s8 = ssub.s32 1, %s6
  %s9 = scalar_select 0, %s8, %s6
  $region1: #{tpu_custom_call.1} parent=0
    #allocation2 [shape = 'u8[8192]{0}', space=vmem, size = 0x2000, scoped, tag = 'input window, operand 0, single buffered']
    #allocation3 [shape = 's32[1]{0}', space=sflag, size = 0x4, scoped, tag = 'scoped memory for tpu_custom_call.1']
    #allocation4 [shape = 's32[1]{0}', space=sflag, size = 0x4, scoped, tag = 'scoped memory for tpu_custom_call.1']
    #allocation5 [shape = 'u8[16384]{0}', space=vmem, size = 0x4000, scoped, tag = 'input window, operand 1, single buffered']
    #allocation6 [shape = 's32[1]{0}', space=sflag, size = 0x4, scoped, tag = 'scoped memory for tpu_custom_call.1']
    #allocation7 [shape = 'u8[1024]{0}', space=vmem, size = 0x400, scoped, tag = 'input window, operand 2, single buffered']
    #allocation8 [shape = 'u8[65536]{0}', space=vmem, size = 0x10000, scoped, tag = 'input window, operand 3, single buffered']
    #allocation9 [shape = 's32[1]{0}', space=sflag, size = 0x4, scoped, tag = 'scoped memory for tpu_custom_call.1']
    #allocation10 [shape = 'u8[8192]{0}', space=vmem, size = 0x2000, scoped, tag = 'output window, operand 0, single buffered']
    %10 = vsyncpa [#allocation3], 0
    %11 = vsyncpa [#allocation6], 0
    %12 = vsyncpa [#allocation9], 0
    %13 = vsyncpa [#allocation4], 0
    // Predicated region
    $region2: #{tpu_custom_call.1} parent=1 // pred_check
      _
    $region3: #{tpu_custom_call.1} parent=1 // pred_check_branch
      %15 = sbr.rel (0) target = $region5
    $region4: #{tpu_custom_call.1} parent=1 // pred_region
      %17 = vsyncadd [#allocation3], 0
      %s18 = sshll.u32 %s0, 4
      %s19 = int_to_ptr.hbm [resolvable:$true] %s18
      %s20 = sshll.u32 [#allocation2], 4
      %s21 = int_to_ptr.vmem [resolvable:$true] %s20
      %26 = dma.hbm_to_vmem [thread:$0]  %s19, 256, %s21, [#allocation3], 128, 128, 8
    $region5: #{tpu_custom_call.1} parent=1 // pred_fallthru
      _
    // Predicated region
    $region6: #{tpu_custom_call.1} parent=1 // pred_check
      _
    $region7: #{tpu_custom_call.1} parent=1 // pred_check_branch
      %28 = sbr.rel (0) target = $region9
    $region8: #{tpu_custom_call.1} parent=1 // pred_region
      %30 = vsyncadd [#allocation6], 0
      %s31 = sshll.u32 %s1, 4
      %s32 = int_to_ptr.hbm [resolvable:$true] %s31
      %s33 = sshll.u32 [#allocation5], 4
      %s34 = int_to_ptr.vmem [resolvable:$true] %s33
      %39 = dma.hbm_to_vmem [thread:$0]  %s32, 512, %s34, [#allocation6], 128, 128, 8
    $region9: #{tpu_custom_call.1} parent=1 // pred_fallthru
      _
    // Predicated region
    $region10: #{tpu_custom_call.1} parent=1 // pred_check
      _
    $region11: #{tpu_custom_call.1} parent=1 // pred_check_branch
      %41 = sbr.rel (0) target = $region13
    $region12: #{tpu_custom_call.1} parent=1 // pred_region
      %43 = vsyncadd [#allocation6], 0
      %s45 = sshll.u32 %s2, 4
      %s46 = int_to_ptr.hbm [resolvable:$true] %s45
      %s47 = sshll.u32 [#allocation7], 4
      %s48 = int_to_ptr.vmem [resolvable:$true] %s47
      %50 = dma.hbm_to_vmem [thread:$0]  %s46, 32, %s48, [#allocation6]
    $region13: #{tpu_custom_call.1} parent=1 // pred_fallthru
      _
    // Predicated region
    $region14: #{tpu_custom_call.1} parent=1 // pred_check
      _
    $region15: #{tpu_custom_call.1} parent=1 // pred_check_branch
      %52 = sbr.rel (0) target = $region17
    $region16: #{tpu_custom_call.1} parent=1 // pred_region
      %54 = vsyncadd [#allocation9], 0
      %s55 = sshll.u32 %s3, 4
      %s56 = int_to_ptr.hbm [resolvable:$true] %s55
      %s57 = sshll.u32 [#allocation8], 4
      %s58 = int_to_ptr.vmem [resolvable:$true] %s57
      %63 = dma.hbm_to_vmem [thread:$0]  %s56, 2048, %s58, [#allocation9], 64, 64, 4
    $region17: #{tpu_custom_call.1} parent=1 // pred_fallthru
      _
    // Predicated region
    $region18: #{tpu_custom_call.1} parent=1 // pred_check
      _
    $region19: #{tpu_custom_call.1} parent=1 // pred_check_branch
      %65 = sbr.rel (0) target = $region21
    $region20: #{tpu_custom_call.1} parent=1 // pred_region
      _
    $region21: #{tpu_custom_call.1} parent=1 // pred_fallthru
      _
    // Predicated region
    $region22: #{tpu_custom_call.1} parent=1 // pred_check
      _
    $region23: #{tpu_custom_call.1} parent=1 // pred_check_branch
      %67 = sbr.rel (0) target = $region25
    $region24: #{tpu_custom_call.1} parent=1 // pred_region
      %69 = dma.done [#allocation3], 256
    $region25: #{tpu_custom_call.1} parent=1 // pred_fallthru
      _
    // Predicated region
    $region26: #{tpu_custom_call.1} parent=1 // pred_check
      _
    $region27: #{tpu_custom_call.1} parent=1 // pred_check_branch
      %71 = sbr.rel (0) target = $region29
    $region28: #{tpu_custom_call.1} parent=1 // pred_region
      %73 = dma.done [#allocation6], 512
    $region29: #{tpu_custom_call.1} parent=1 // pred_fallthru
      _
    // Predicated region
    $region30: #{tpu_custom_call.1} parent=1 // pred_check
      _
    $region31: #{tpu_custom_call.1} parent=1 // pred_check_branch
      %75 = sbr.rel (0) target = $region33
    $region32: #{tpu_custom_call.1} parent=1 // pred_region
      %77 = dma.done [#allocation6], 32
    $region33: #{tpu_custom_call.1} parent=1 // pred_fallthru
      _
    // Predicated region
    $region34: #{tpu_custom_call.1} parent=1 // pred_check
      _
    $region35: #{tpu_custom_call.1} parent=1 // pred_check_branch
      %79 = sbr.rel (0) target = $region37
    $region36: #{tpu_custom_call.1} parent=1 // pred_region
      %81 = dma.done [#allocation9], 2048
    $region37: #{tpu_custom_call.1} parent=1 // pred_fallthru
      _
    %v83 = vld [vmem:[#allocation2] sm:$0xff]
    %v84 = vld [vmem:[#allocation2 + $0x8] sm:$0xff]
    %v85 = vpack.c.bf16 %v84, %v83
    %v86 = vld [vmem:[#allocation5] sm:$0xff]
    %v87 = vld [vmem:[#allocation5 + $0x8] sm:$0xff]
    %v88 = vld [vmem:[#allocation5 + $0x10] sm:$0xff]
    %v89 = vld [vmem:[#allocation5 + $0x18] sm:$0xff]
    %v90 = vld [vmem:[#allocation7] sm:$0x3]
    %v92 = vperm.slane %v90, 0
    %v93 = vperm.slane %v90, 1
    %v100 = vunpack.c.l.b16 %v86
    %v101 = vunpack.c.h.b16 %v86
    %v102 = vunpack.c.l.b16 %v87
    %v103 = vunpack.c.h.b16 %v87
    %v104 = vunpack.c.l.b16 %v88
    %v105 = vunpack.c.h.b16 %v88
    %v106 = vunpack.c.l.b16 %v89
    %v107 = vunpack.c.h.b16 %v89
    %v108 = vpack.c.b16 %v102, %v100
    %v109 = vpack.c.b16 %v103, %v101
    %v110 = vpack.c.b16 %v106, %v104
    %v111 = vpack.c.b16 %v107, %v105
    %vm116 = vcmask 261120
    %v118 = vsel %vm116, %v85, 0
    %120 = vmatpush.bf16.msra.mxu0 0
    %121 = vmatpush.bf16.msra.mxu0 0
    %122 = vmatpush.bf16.msra.mxu0 0
    %123 = vmatpush.bf16.msra.mxu0 0
    %124 = vmatpush.bf16.msra.mxu0 0
    %125 = vmatpush.bf16.msra.mxu0 0
    %126 = vmatpush.bf16.msra.mxu0 %v110
    %127 = vmatpush.bf16.msra.mxu0 %v108
    %128 = vmatmul.bf16.gmra.mxu0 %v118
    %v129 = vpop.f32.mrf.mxu0
    %v130 = vadd.f32 %v92, %v129
    %v131 = vpop.f32.mrf.mxu0
    %v132 = vadd.f32 %v92, %v131
    %133 = vdwg.mxu0
    %134 = vmatpush.bf16.msra.mxu0 0
    %135 = vmatpush.bf16.msra.mxu0 0
    %136 = vmatpush.bf16.msra.mxu0 0
    %137 = vmatpush.bf16.msra.mxu0 0
    %138 = vmatpush.bf16.msra.mxu0 0
    %139 = vmatpush.bf16.msra.mxu0 0
    %140 = vmatpush.bf16.msra.mxu0 %v111
    %141 = vmatpush.bf16.msra.mxu0 %v109
    %142 = vmatmul.bf16.gmra.mxu0 %v118
    %v143 = vpop.f32.mrf.mxu0
    %v144 = vadd.f32 %v93, %v143
    %v145 = vpop.f32.mrf.mxu0
    %v146 = vadd.f32 %v93, %v145
    %147 = vdwg.mxu0
    %v148 = vpack.c.bf16 %v132, %v130
    %v149 = vpack.c.bf16 %v146, %v144
    %v150 = vunpack.c.l.bf16 %v148
    %v151 = vunpack.c.l.bf16 %v149
    %v152 = vunpack.c.h.bf16 %v148
    %v153 = vunpack.c.h.bf16 %v149
    %v154 = vtanh.pop %v150
    %v155 = vtanh.pop %v151
    %v156 = vtanh.pop %v152
    %v157 = vtanh.pop %v153
    %v158 = vpack.c.bf16 %v156, %v154
    %v159 = vpack.c.bf16 %v157, %v155
    %v160 = vld [vmem:[#allocation8] sm:$0xf]
    %v161 = vld [vmem:[#allocation8 + $0x4] sm:$0xf]
    %v162 = vld [vmem:[#allocation8 + $0x8] sm:$0xf]
    %v163 = vld [vmem:[#allocation8 + $0xc] sm:$0xf]
    %v164 = vld [vmem:[#allocation8 + $0x10] sm:$0xf]
    %v165 = vld [vmem:[#allocation8 + $0x14] sm:$0xf]
    %v166 = vld [vmem:[#allocation8 + $0x18] sm:$0xf]
    %v167 = vld [vmem:[#allocation8 + $0x1c] sm:$0xf]
    %v168 = vld [vmem:[#allocation8 + $0x20] sm:$0xf]
    %v169 = vld [vmem:[#allocation8 + $0x24] sm:$0xf]
    %v170 = vld [vmem:[#allocation8 + $0x28] sm:$0xf]
    %v171 = vld [vmem:[#allocation8 + $0x2c] sm:$0xf]
    %v172 = vld [vmem:[#allocation8 + $0x30] sm:$0xf]
    %v173 = vld [vmem:[#allocation8 + $0x34] sm:$0xf]
    %v174 = vld [vmem:[#allocation8 + $0x38] sm:$0xf]
    %v175 = vld [vmem:[#allocation8 + $0x3c] sm:$0xf]
    %v176 = vld [vmem:[#allocation8 + $0x40] sm:$0xf]
    %v177 = vld [vmem:[#allocation8 + $0x44] sm:$0xf]
    %v178 = vld [vmem:[#allocation8 + $0x48] sm:$0xf]
    %v179 = vld [vmem:[#allocation8 + $0x4c] sm:$0xf]
    %v180 = vld [vmem:[#allocation8 + $0x50] sm:$0xf]
    %v181 = vld [vmem:[#allocation8 + $0x54] sm:$0xf]
    %v182 = vld [vmem:[#allocation8 + $0x58] sm:$0xf]
    %v183 = vld [vmem:[#allocation8 + $0x5c] sm:$0xf]
    %v184 = vld [vmem:[#allocation8 + $0x60] sm:$0xf]
    %v185 = vld [vmem:[#allocation8 + $0x64] sm:$0xf]
    %v186 = vld [vmem:[#allocation8 + $0x68] sm:$0xf]
    %v187 = vld [vmem:[#allocation8 + $0x6c] sm:$0xf]
    %v188 = vld [vmem:[#allocation8 + $0x70] sm:$0xf]
    %v189 = vld [vmem:[#allocation8 + $0x74] sm:$0xf]
    %v190 = vld [vmem:[#allocation8 + $0x78] sm:$0xf]
    %v191 = vld [vmem:[#allocation8 + $0x7c] sm:$0xf]
    %v192 = vld [vmem:[%s4] sm:$0x1]
    %v194 = vperm.slane %v192, 0
    %v228 = vunpack.c.l.b16 %v160
    %v229 = vunpack.c.l.b16 %v161
    %v230 = vunpack.c.l.b16 %v162
    %v231 = vunpack.c.l.b16 %v163
    %v232 = vunpack.c.l.b16 %v164
    %v233 = vunpack.c.l.b16 %v165
    %v234 = vunpack.c.l.b16 %v166
    %v235 = vunpack.c.l.b16 %v167
    %v236 = vunpack.c.l.b16 %v168
    %v237 = vunpack.c.l.b16 %v169
    %v238 = vunpack.c.l.b16 %v170
    %v239 = vunpack.c.l.b16 %v171
    %v240 = vunpack.c.l.b16 %v172
    %v241 = vunpack.c.l.b16 %v173
    %v242 = vunpack.c.l.b16 %v174
    %v243 = vunpack.c.l.b16 %v175
    %v244 = vunpack.c.l.b16 %v176
    %v245 = vunpack.c.l.b16 %v177
    %v246 = vunpack.c.l.b16 %v178
    %v247 = vunpack.c.l.b16 %v179
    %v248 = vunpack.c.l.b16 %v180
    %v249 = vunpack.c.l.b16 %v181
    %v250 = vunpack.c.l.b16 %v182
    %v251 = vunpack.c.l.b16 %v183
    %v252 = vunpack.c.l.b16 %v184
    %v253 = vunpack.c.l.b16 %v185
    %v254 = vunpack.c.l.b16 %v186
    %v255 = vunpack.c.l.b16 %v187
    %v256 = vunpack.c.l.b16 %v188
    %v257 = vunpack.c.l.b16 %v189
    %v258 = vunpack.c.l.b16 %v190
    %v259 = vunpack.c.l.b16 %v191
    %v260 = vpack.c.b16 %v229, %v228
    %v261 = vpack.c.b16 %v231, %v230
    %v262 = vpack.c.b16 %v233, %v232
    %v263 = vpack.c.b16 %v235, %v234
    %v264 = vpack.c.b16 %v237, %v236
    %v265 = vpack.c.b16 %v239, %v238
    %v266 = vpack.c.b16 %v241, %v240
    %v267 = vpack.c.b16 %v243, %v242
    %v268 = vpack.c.b16 %v245, %v244
    %v269 = vpack.c.b16 %v247, %v246
    %v270 = vpack.c.b16 %v249, %v248
    %v271 = vpack.c.b16 %v251, %v250
    %v272 = vpack.c.b16 %v253, %v252
    %v273 = vpack.c.b16 %v255, %v254
    %v274 = vpack.c.b16 %v257, %v256
    %v275 = vpack.c.b16 %v259, %v258
    %292 = vmatpush.bf16.msra.mxu0 %v267
    %293 = vmatpush.bf16.msra.mxu0 %v266
    %294 = vmatpush.bf16.msra.mxu0 %v265
    %295 = vmatpush.bf16.msra.mxu0 %v264
    %296 = vmatpush.bf16.msra.mxu0 %v263
    %297 = vmatpush.bf16.msra.mxu0 %v262
    %298 = vmatpush.bf16.msra.mxu0 %v261
    %299 = vmatpush.bf16.msra.mxu0 %v260
    %300 = vmatmul.bf16.gmra.mxu0 %v158
    %v301 = vpop.f32.mrf.mxu0
    %v302 = vadd.f32 %v194, %v301
    %v303 = vpop.f32.mrf.mxu0
    %v304 = vadd.f32 %v194, %v303
    %305 = vdwg.mxu0
    %306 = vmatpush.bf16.msra.mxu0 %v275
    %307 = vmatpush.bf16.msra.mxu0 %v274
    %308 = vmatpush.bf16.msra.mxu0 %v273
    %309 = vmatpush.bf16.msra.mxu0 %v272
    %310 = vmatpush.bf16.msra.mxu0 %v271
    %311 = vmatpush.bf16.msra.mxu0 %v270
    %312 = vmatpush.bf16.msra.mxu0 %v269
    %313 = vmatpush.bf16.msra.mxu0 %v268
    %314 = vmatmul.bf16.gmra.mxu0 %v159
    %v315 = vpop.f32.mrf.mxu0
    %v316 = vadd.f32 %v302, %v315
    %v317 = vpop.f32.mrf.mxu0
    %v318 = vadd.f32 %v304, %v317
    %319 = vdwg.mxu0
    %v320 = vtanh.pop %v316
    %v321 = vtanh.pop %v318
    %322 = vst [vmem:[#allocation10] sm:$0xff] %v320
    %323 = vst [vmem:[#allocation10 + $0x8] sm:$0xff] %v321
    // Predicated region
    $region38: #{tpu_custom_call.1} parent=1 // pred_check
      _
    $region39: #{tpu_custom_call.1} parent=1 // pred_check_branch
      %325 = sbr.rel (0) target = $region41
    $region40: #{tpu_custom_call.1} parent=1 // pred_region
      %327 = vsyncadd [#allocation4], 0
      %s328 = sshll.u32 [#allocation10], 4
      %s329 = int_to_ptr.vmem [resolvable:$true] %s328
      %s330 = sshll.u32 %s5, 4
      %s331 = int_to_ptr.hbm [resolvable:$true] %s330
      %336 = dma.vmem_to_hbm [thread:$0]  %s329, 256, %s331, [#allocation4], 128, 128, 8
    $region41: #{tpu_custom_call.1} parent=1 // pred_fallthru
      _
    // Predicated region
    $region42: #{tpu_custom_call.1} parent=1 // pred_check
      _
    $region43: #{tpu_custom_call.1} parent=1 // pred_check_branch
      %338 = sbr.rel (0) target = $region45
    $region44: #{tpu_custom_call.1} parent=1 // pred_region
      %340 = dma.done [#allocation4], 256
    $region45: #{tpu_custom_call.1} parent=1 // pred_fallthru
      _
    %341 = vsyncpa [#allocation3], 1
    %342 = vsyncpa [#allocation6], 1
    %343 = vsyncpa [#allocation9], 1
    %344 = vsyncpa [#allocation4], 1

</llo_original>
